<compile_context>
chip_gen: v5e
topology: v5e:2x2
jax: 0.10.0
libtpu: 0.0.40
codegen_flags: <defaults>
</compile_context>

<pallas_src>
import jax
import jax.numpy as jnp
from jax import lax
from jax.experimental import pallas as pl
from jax.experimental.pallas import tpu as pltpu

GRID_NUM = 7          # S
NUM_BOX = 2           # B
L_COORD = 5.0
L_NOOBJ = 0.5
FEAT = NUM_BOX * 5 + 20   # 30 channels per cell

_MAX_TILE = 2048          # cells per grid step (multiple of 8 and 128)


def _make_kernel(tile_m, m_total, s_grid, l_coord, l_noobj):
    """Build the Pallas kernel body with hyper-params / tiling baked in."""
    inv_s = 1.0 / float(s_grid)

    def kernel(p_ref, t_ref, out_ref):
        # Blocks are (tile_m, 30): cells on sublanes, channels on lanes
        # (the natural HBM layout -- no host transpose).
        pv = p_ref[...].astype(jnp.float32)
        tv = t_ref[...].astype(jnp.float32)

        # Per-tile channel-major repack on the idle MXU:
        #   out[c, m] = sum_k eye[c, k] * x[m, k]  ==  x[m, c]
        ir = lax.broadcasted_iota(jnp.int32, (FEAT, FEAT), 0)
        ic = lax.broadcasted_iota(jnp.int32, (FEAT, FEAT), 1)
        eye = (ir == ic).astype(jnp.float32)
        dims = (((1,), (1,)), ((), ()))
        p = lax.dot_general(eye, pv, dims,
                            precision=lax.Precision.HIGHEST,
                            preferred_element_type=jnp.float32)   # (30, tile_m)
        t = lax.dot_general(eye, tv, dims,
                            precision=lax.Precision.HIGHEST,
                            preferred_element_type=jnp.float32)   # (30, tile_m)

        def row(a, i):                      # -> (1, tile_m)
            return a[i:i + 1, :]

        # Valid-cell mask for a (possibly partial) last tile.
        cell = (pl.program_id(0) * tile_m
                + lax.broadcasted_iota(jnp.int32, (1, tile_m), 1))
        valid = cell < m_total

        t4, t9 = row(t, 4), row(t, 9)
        p4, p9 = row(p, 4), row(p, 9)
        obj = jnp.logical_and(t4 > 0.0, valid)       # cells with an object
        noobj = jnp.logical_and(t4 == 0.0, valid)    # cells without an object

        # ---- no-object confidence loss (channels 4 and 9 of noobj cells) ----
        noo = (p4 - t4) ** 2 + (p9 - t9) ** 2
        nooobj_loss = jnp.sum(jnp.where(noobj, noo, 0.0))

        # ---- class loss over object cells (channels 10..29) ----
        cls_sq = (p[10:FEAT, :] - t[10:FEAT, :]) ** 2          # (20, tile_m)
        cls_per_cell = jnp.sum(cls_sq, axis=0, keepdims=True)  # (1, tile_m)
        class_loss = jnp.sum(jnp.where(obj, cls_per_cell, 0.0))

        # ---- IoU of both predicted boxes vs. the (first) target box ----
        def to_xyxy(x, y, w, h):
            cx = x * inv_s
            cy = y * inv_s
            hw = 0.5 * w
            hh = 0.5 * h
            return cx - hw, cy - hh, cx + hw, cy + hh

        def area(b):
            x1, y1, x2, y2 = b
            return (x2 - x1) * (y2 - y1)

        p0 = to_xyxy(row(p, 0), row(p, 1), row(p, 2), row(p, 3))
        p1 = to_xyxy(row(p, 5), row(p, 6), row(p, 7), row(p, 8))
        tb = to_xyxy(row(t, 0), row(t, 1), row(t, 2), row(t, 3))
        a_tb = area(tb)                     # hoisted: shared by both IoUs

        def iou(a, a_area, b, b_area):
            ax1, ay1, ax2, ay2 = a
            bx1, by1, bx2, by2 = b
            iw = jnp.maximum(jnp.minimum(ax2, bx2) - jnp.maximum(ax1, bx1), 0.0)
            ih = jnp.maximum(jnp.minimum(ay2, by2) - jnp.maximum(ay1, by1), 0.0)
            inter = iw * ih
            # EUP approximate reciprocal instead of a VALU divide.
            return inter * pl.reciprocal(a_area + b_area - inter, approx=True)

        iou0 = iou(p0, area(p0), tb, a_tb)
        iou1 = iou(p1, area(p1), tb, a_tb)

        sel1 = iou1 > iou0                  # responsible predictor == box 1
        max_iou = jnp.maximum(iou0, iou1)

        def pick(a, hi, lo):                # channel of the responsible box
            return jnp.where(sel1, row(a, hi), row(a, lo))

        rp_x, rp_y = pick(p, 5, 0), pick(p, 6, 1)
        rp_w, rp_h = pick(p, 7, 2), pick(p, 8, 3)
        rp_c = pick(p, 9, 4)
        np_c = jnp.where(sel1, row(p, 4), row(p, 9))   # not-responsible conf
        rt_x, rt_y = pick(t, 5, 0), pick(t, 6, 1)
        rt_w, rt_h = pick(t, 7, 2), pick(t, 8, 3)

        # ---- contain / localization / not-contain losses ----
        contain_loss = jnp.sum(jnp.where(obj, (rp_c - max_iou) ** 2, 0.0))

        # sqrt of raw predictions, exactly like the PyTorch reference
        # (negative predicted w/h would give NaN there too).
        loc = ((rp_x - rt_x) ** 2 + (rp_y - rt_y) ** 2
               + (jnp.sqrt(rp_w) - jnp.sqrt(rt_w)) ** 2
               + (jnp.sqrt(rp_h) - jnp.sqrt(rt_h)) ** 2)
        loc_loss = jnp.sum(jnp.where(obj, loc, 0.0))

        not_contain_loss = jnp.sum(jnp.where(obj, np_c ** 2, 0.0))

        total = (l_coord * loc_loss + 2.0 * contain_loss + not_contain_loss
                 + l_noobj * nooobj_loss + class_loss)

        # Lane-dense (8,128) partial-sum block; wrapper reads [0, 0].
        out_ref[...] = jnp.full((1, 8, 128), total, dtype=jnp.float32)

    return kernel


def yolov1_loss(pred, target, *, s=GRID_NUM, l_coord=L_COORD, l_noobj=L_NOOBJ):
    """pred, target: (N, S, S, 30) arrays (f32 or bf16). Returns scalar loss."""
    n, sh, sw, f = pred.shape
    assert f == FEAT and target.shape == pred.shape
    m = n * sh * sw

    # Free reshapes only -- keep the natural cell-major layout in HBM.
    p2 = pred.reshape(m, FEAT)
    t2 = target.reshape(m, FEAT)

    # Tile over cells; for small inputs use a single exact-size block.
    tile_m = m if m <= _MAX_TILE else _MAX_TILE
    num_tiles = pl.cdiv(m, tile_m)

    kernel = _make_kernel(tile_m, m, float(s), float(l_coord), float(l_noobj))
    partial = pl.pallas_call(
        kernel,
        out_shape=jax.ShapeDtypeStruct((num_tiles, 8, 128), jnp.float32),
        grid=(num_tiles,),
        in_specs=[pl.BlockSpec((tile_m, FEAT), lambda i: (i, 0)),
                  pl.BlockSpec((tile_m, FEAT), lambda i: (i, 0))],
        out_specs=pl.BlockSpec((1, 8, 128), lambda i: (i, 0, 0)),
        compiler_params=pltpu.CompilerParams(
            dimension_semantics=("parallel",),
            vmem_limit_bytes=32 * 1024 * 1024),
    )(p2, t2)

    # Independent per-tile partial sums (parallel across cores) -> reduce here.
    return jnp.sum(partial[:, 0, 0]) / n


if __name__ == "__main__":
    key = jax.random.PRNGKey(0)
    kp, kt, kc = jax.random.split(key, 3)

    N, S = 2, GRID_NUM
    # Keep widths/heights strictly positive so sqrt() in loc_loss stays finite,
    # exactly like a real YOLOv1 prediction/target encoding would.
    pred = jax.random.uniform(kp, (N, S, S, FEAT), jnp.float32, 0.05, 0.95)
    target = jax.random.uniform(kt, (N, S, S, FEAT), jnp.float32, 0.05, 0.95)
    conf = (jax.random.uniform(kc, (N, S, S)) > 0.5).astype(jnp.float32)
    target = target.at[..., 4].set(conf)   # objectness of box 0
    target = target.at[..., 9].set(conf)   # objectness of box 1

    loss = jax.block_until_ready(yolov1_loss(pred, target))
    assert jnp.isfinite(loss), f"loss is not finite: {loss}"
    print("KERNEL_OK")
</pallas_src>

<mosaic_0001>
module attributes {stable_mosaic.version = 11 : i64} {
  func.func @kernel(%arg0: i32, %arg1: memref<98x30xf32, #tpu.memory_space<vmem>>, %arg2: memref<98x30xf32, #tpu.memory_space<vmem>>, %arg3: memref<1x8x128xf32, #tpu.memory_space<vmem>>) attributes {dimension_semantics = [#tpu.dimension_semantics<parallel>], iteration_bounds = array<i64: 1>, scalar_prefetch = 0 : i64, scratch_operands = 0 : i64, tpu.core_type = #tpu.core_type<tc>, window_params = [{transform_indices = @transform_0, window_bounds = array<i64: 98, 30>}, {transform_indices = @transform_1, window_bounds = array<i64: 98, 30>}, {transform_indices = @transform_2, window_bounds = array<i64: 1, 8, 128>}]} {
    %c0 = arith.constant 0 : index
    %c0_0 = arith.constant 0 : index
    %0 = vector.load %arg1[%c0, %c0_0] : memref<98x30xf32, #tpu.memory_space<vmem>>, vector<98x30xf32>
    %c0_1 = arith.constant 0 : index
    %c0_2 = arith.constant 0 : index
    %1 = vector.load %arg2[%c0_1, %c0_2] : memref<98x30xf32, #tpu.memory_space<vmem>>, vector<98x30xf32>
    %2 = tpu.iota {dimensions = array<i32: 0>} : vector<30x30xi32>
    %3 = tpu.iota {dimensions = array<i32: 1>} : vector<30x30xi32>
    %4 = arith.cmpi eq, %2, %3 : vector<30x30xi32>
    %5 = arith.extui %4 : vector<30x30xi1> to vector<30x30xi32>
    %6 = arith.sitofp %5 : vector<30x30xi32> to vector<30x30xf32>
    %cst = arith.constant dense<0.000000e+00> : vector<30x98xf32>
    %7 = tpu.matmul %6, %0, %cst {dimension_numbers = #tpu.dot_dimension_numbers<[1], [1], [0], [0], [0, 0, 1, 0], [], []>, precision = #tpu.contract_precision<fp32>} : vector<30x30xf32>, vector<98x30xf32>, vector<30x98xf32> -> vector<30x98xf32>
    %cst_3 = arith.constant dense<0.000000e+00> : vector<30x98xf32>
    %8 = tpu.matmul %6, %1, %cst_3 {dimension_numbers = #tpu.dot_dimension_numbers<[1], [1], [0], [0], [0, 0, 1, 0], [], []>, precision = #tpu.contract_precision<fp32>} : vector<30x30xf32>, vector<98x30xf32>, vector<30x98xf32> -> vector<30x98xf32>
    %c98_i32 = arith.constant 98 : i32
    %9 = arith.muli %arg0, %c98_i32 : i32
    %10 = tpu.iota {dimensions = array<i32: 1>} : vector<1x98xi32>
    %11 = vector.broadcast %9 : i32 to vector<1x98xi32>
    %12 = arith.addi %11, %10 : vector<1x98xi32>
    %c98_i32_4 = arith.constant 98 : i32
    %13 = vector.broadcast %c98_i32_4 : i32 to vector<1x98xi32>
    %14 = arith.cmpi slt, %12, %13 : vector<1x98xi32>
    %15 = vector.extract_strided_slice %8 {offsets = [4, 0], sizes = [1, 98], strides = [1, 1]} : vector<30x98xf32> to vector<1x98xf32>
    %16 = vector.extract_strided_slice %8 {offsets = [9, 0], sizes = [1, 98], strides = [1, 1]} : vector<30x98xf32> to vector<1x98xf32>
    %17 = vector.extract_strided_slice %7 {offsets = [4, 0], sizes = [1, 98], strides = [1, 1]} : vector<30x98xf32> to vector<1x98xf32>
    %18 = vector.extract_strided_slice %7 {offsets = [9, 0], sizes = [1, 98], strides = [1, 1]} : vector<30x98xf32> to vector<1x98xf32>
    %cst_5 = arith.constant 0.000000e+00 : f32
    %19 = vector.broadcast %cst_5 : f32 to vector<1x98xf32>
    %20 = arith.cmpf ogt, %15, %19 : vector<1x98xf32>
    %21 = arith.andi %20, %14 : vector<1x98xi1>
    %cst_6 = arith.constant 0.000000e+00 : f32
    %22 = vector.broadcast %cst_6 : f32 to vector<1x98xf32>
    %23 = arith.cmpf oeq, %15, %22 : vector<1x98xf32>
    %24 = arith.andi %23, %14 : vector<1x98xi1>
    %25 = arith.subf %17, %15 : vector<1x98xf32>
    %26 = arith.mulf %25, %25 : vector<1x98xf32>
    %27 = arith.subf %18, %16 : vector<1x98xf32>
    %28 = arith.mulf %27, %27 : vector<1x98xf32>
    %29 = arith.addf %26, %28 : vector<1x98xf32>
    %cst_7 = arith.constant 0.000000e+00 : f32
    %30 = vector.broadcast %cst_7 : f32 to vector<1x98xf32>
    %31 = arith.select %24, %29, %30 : vector<1x98xi1>, vector<1x98xf32>
    %32 = vector.shape_cast %31 : vector<1x98xf32> to vector<1x1x98xf32>
    %cst_8 = arith.constant dense<0.000000e+00> : vector<1xf32>
    %33 = vector.multi_reduction <add>, %32, %cst_8 [1, 2] : vector<1x1x98xf32> to vector<1xf32>
    %34 = vector.shape_cast %33 : vector<1xf32> to vector<1x1x1xf32>
    %35 = vector.extract %34[0, 0, 0] : f32 from vector<1x1x1xf32>
    %36 = vector.extract_strided_slice %7 {offsets = [10, 0], sizes = [20, 98], strides = [1, 1]} : vector<30x98xf32> to vector<20x98xf32>
    %37 = vector.extract_strided_slice %8 {offsets = [10, 0], sizes = [20, 98], strides = [1, 1]} : vector<30x98xf32> to vector<20x98xf32>
    %38 = arith.subf %36, %37 : vector<20x98xf32>
    %39 = arith.mulf %38, %38 : vector<20x98xf32>
    %cst_9 = arith.constant dense<0.000000e+00> : vector<98xf32>
    %40 = vector.multi_reduction <add>, %39, %cst_9 [0] : vector<20x98xf32> to vector<98xf32>
    %41 = vector.shape_cast %40 : vector<98xf32> to vector<1x98xf32>
    %cst_10 = arith.constant 0.000000e+00 : f32
    %42 = vector.broadcast %cst_10 : f32 to vector<1x98xf32>
    %43 = arith.select %21, %41, %42 : vector<1x98xi1>, vector<1x98xf32>
    %44 = vector.shape_cast %43 : vector<1x98xf32> to vector<1x1x98xf32>
    %cst_11 = arith.constant dense<0.000000e+00> : vector<1xf32>
    %45 = vector.multi_reduction <add>, %44, %cst_11 [1, 2] : vector<1x1x98xf32> to vector<1xf32>
    %46 = vector.shape_cast %45 : vector<1xf32> to vector<1x1x1xf32>
    %47 = vector.extract %46[0, 0, 0] : f32 from vector<1x1x1xf32>
    %48 = vector.extract_strided_slice %7 {offsets = [0, 0], sizes = [1, 98], strides = [1, 1]} : vector<30x98xf32> to vector<1x98xf32>
    %49 = vector.extract_strided_slice %7 {offsets = [1, 0], sizes = [1, 98], strides = [1, 1]} : vector<30x98xf32> to vector<1x98xf32>
    %50 = vector.extract_strided_slice %7 {offsets = [2, 0], sizes = [1, 98], strides = [1, 1]} : vector<30x98xf32> to vector<1x98xf32>
    %51 = vector.extract_strided_slice %7 {offsets = [3, 0], sizes = [1, 98], strides = [1, 1]} : vector<30x98xf32> to vector<1x98xf32>
    %cst_12 = arith.constant 0.142857149 : f32
    %52 = vector.broadcast %cst_12 : f32 to vector<1x98xf32>
    %53 = arith.mulf %48, %52 : vector<1x98xf32>
    %cst_13 = arith.constant 0.142857149 : f32
    %54 = vector.broadcast %cst_13 : f32 to vector<1x98xf32>
    %55 = arith.mulf %49, %54 : vector<1x98xf32>
    %cst_14 = arith.constant 5.000000e-01 : f32
    %56 = vector.broadcast %cst_14 : f32 to vector<1x98xf32>
    %57 = arith.mulf %56, %50 : vector<1x98xf32>
    %cst_15 = arith.constant 5.000000e-01 : f32
    %58 = vector.broadcast %cst_15 : f32 to vector<1x98xf32>
    %59 = arith.mulf %58, %51 : vector<1x98xf32>
    %60 = arith.subf %53, %57 : vector<1x98xf32>
    %61 = arith.subf %55, %59 : vector<1x98xf32>
    %62 = arith.addf %53, %57 : vector<1x98xf32>
    %63 = arith.addf %55, %59 : vector<1x98xf32>
    %64 = vector.extract_strided_slice %7 {offsets = [5, 0], sizes = [1, 98], strides = [1, 1]} : vector<30x98xf32> to vector<1x98xf32>
    %65 = vector.extract_strided_slice %7 {offsets = [6, 0], sizes = [1, 98], strides = [1, 1]} : vector<30x98xf32> to vector<1x98xf32>
    %66 = vector.extract_strided_slice %7 {offsets = [7, 0], sizes = [1, 98], strides = [1, 1]} : vector<30x98xf32> to vector<1x98xf32>
    %67 = vector.extract_strided_slice %7 {offsets = [8, 0], sizes = [1, 98], strides = [1, 1]} : vector<30x98xf32> to vector<1x98xf32>
    %cst_16 = arith.constant 0.142857149 : f32
    %68 = vector.broadcast %cst_16 : f32 to vector<1x98xf32>
    %69 = arith.mulf %64, %68 : vector<1x98xf32>
    %cst_17 = arith.constant 0.142857149 : f32
    %70 = vector.broadcast %cst_17 : f32 to vector<1x98xf32>
    %71 = arith.mulf %65, %70 : vector<1x98xf32>
    %cst_18 = arith.constant 5.000000e-01 : f32
    %72 = vector.broadcast %cst_18 : f32 to vector<1x98xf32>
    %73 = arith.mulf %72, %66 : vector<1x98xf32>
    %cst_19 = arith.constant 5.000000e-01 : f32
    %74 = vector.broadcast %cst_19 : f32 to vector<1x98xf32>
    %75 = arith.mulf %74, %67 : vector<1x98xf32>
    %76 = arith.subf %69, %73 : vector<1x98xf32>
    %77 = arith.subf %71, %75 : vector<1x98xf32>
    %78 = arith.addf %69, %73 : vector<1x98xf32>
    %79 = arith.addf %71, %75 : vector<1x98xf32>
    %80 = vector.extract_strided_slice %8 {offsets = [0, 0], sizes = [1, 98], strides = [1, 1]} : vector<30x98xf32> to vector<1x98xf32>
    %81 = vector.extract_strided_slice %8 {offsets = [1, 0], sizes = [1, 98], strides = [1, 1]} : vector<30x98xf32> to vector<1x98xf32>
    %82 = vector.extract_strided_slice %8 {offsets = [2, 0], sizes = [1, 98], strides = [1, 1]} : vector<30x98xf32> to vector<1x98xf32>
    %83 = vector.extract_strided_slice %8 {offsets = [3, 0], sizes = [1, 98], strides = [1, 1]} : vector<30x98xf32> to vector<1x98xf32>
    %cst_20 = arith.constant 0.142857149 : f32
    %84 = vector.broadcast %cst_20 : f32 to vector<1x98xf32>
    %85 = arith.mulf %80, %84 : vector<1x98xf32>
    %cst_21 = arith.constant 0.142857149 : f32
    %86 = vector.broadcast %cst_21 : f32 to vector<1x98xf32>
    %87 = arith.mulf %81, %86 : vector<1x98xf32>
    %cst_22 = arith.constant 5.000000e-01 : f32
    %88 = vector.broadcast %cst_22 : f32 to vector<1x98xf32>
    %89 = arith.mulf %88, %82 : vector<1x98xf32>
    %cst_23 = arith.constant 5.000000e-01 : f32
    %90 = vector.broadcast %cst_23 : f32 to vector<1x98xf32>
    %91 = arith.mulf %90, %83 : vector<1x98xf32>
    %92 = arith.subf %85, %89 : vector<1x98xf32>
    %93 = arith.subf %87, %91 : vector<1x98xf32>
    %94 = arith.addf %85, %89 : vector<1x98xf32>
    %95 = arith.addf %87, %91 : vector<1x98xf32>
    %96 = arith.subf %94, %92 : vector<1x98xf32>
    %97 = arith.subf %95, %93 : vector<1x98xf32>
    %98 = arith.mulf %96, %97 : vector<1x98xf32>
    %99 = arith.subf %62, %60 : vector<1x98xf32>
    %100 = arith.subf %63, %61 : vector<1x98xf32>
    %101 = arith.mulf %99, %100 : vector<1x98xf32>
    %102 = arith.minimumf %62, %94 : vector<1x98xf32>
    %103 = arith.maximumf %60, %92 : vector<1x98xf32>
    %104 = arith.subf %102, %103 : vector<1x98xf32>
    %cst_24 = arith.constant 0.000000e+00 : f32
    %105 = vector.broadcast %cst_24 : f32 to vector<1x98xf32>
    %106 = arith.maximumf %104, %105 : vector<1x98xf32>
    %107 = arith.minimumf %63, %95 : vector<1x98xf32>
    %108 = arith.maximumf %61, %93 : vector<1x98xf32>
    %109 = arith.subf %107, %108 : vector<1x98xf32>
    %cst_25 = arith.constant 0.000000e+00 : f32
    %110 = vector.broadcast %cst_25 : f32 to vector<1x98xf32>
    %111 = arith.maximumf %109, %110 : vector<1x98xf32>
    %112 = arith.mulf %106, %111 : vector<1x98xf32>
    %113 = arith.addf %101, %98 : vector<1x98xf32>
    %114 = arith.subf %113, %112 : vector<1x98xf32>
    %115 = tpu.reciprocal %114 {approx = true} : vector<1x98xf32> -> vector<1x98xf32>
    %116 = arith.mulf %112, %115 : vector<1x98xf32>
    %117 = arith.subf %78, %76 : vector<1x98xf32>
    %118 = arith.subf %79, %77 : vector<1x98xf32>
    %119 = arith.mulf %117, %118 : vector<1x98xf32>
    %120 = arith.minimumf %78, %94 : vector<1x98xf32>
    %121 = arith.maximumf %76, %92 : vector<1x98xf32>
    %122 = arith.subf %120, %121 : vector<1x98xf32>
    %cst_26 = arith.constant 0.000000e+00 : f32
    %123 = vector.broadcast %cst_26 : f32 to vector<1x98xf32>
    %124 = arith.maximumf %122, %123 : vector<1x98xf32>
    %125 = arith.minimumf %79, %95 : vector<1x98xf32>
    %126 = arith.maximumf %77, %93 : vector<1x98xf32>
    %127 = arith.subf %125, %126 : vector<1x98xf32>
    %cst_27 = arith.constant 0.000000e+00 : f32
    %128 = vector.broadcast %cst_27 : f32 to vector<1x98xf32>
    %129 = arith.maximumf %127, %128 : vector<1x98xf32>
    %130 = arith.mulf %124, %129 : vector<1x98xf32>
    %131 = arith.addf %119, %98 : vector<1x98xf32>
    %132 = arith.subf %131, %130 : vector<1x98xf32>
    %133 = tpu.reciprocal %132 {approx = true} : vector<1x98xf32> -> vector<1x98xf32>
    %134 = arith.mulf %130, %133 : vector<1x98xf32>
    %135 = arith.cmpf ogt, %134, %116 : vector<1x98xf32>
    %136 = arith.maximumf %116, %134 : vector<1x98xf32>
    %137 = vector.extract_strided_slice %7 {offsets = [5, 0], sizes = [1, 98], strides = [1, 1]} : vector<30x98xf32> to vector<1x98xf32>
    %138 = vector.extract_strided_slice %7 {offsets = [0, 0], sizes = [1, 98], strides = [1, 1]} : vector<30x98xf32> to vector<1x98xf32>
    %139 = arith.select %135, %137, %138 : vector<1x98xi1>, vector<1x98xf32>
    %140 = vector.extract_strided_slice %7 {offsets = [6, 0], sizes = [1, 98], strides = [1, 1]} : vector<30x98xf32> to vector<1x98xf32>
    %141 = vector.extract_strided_slice %7 {offsets = [1, 0], sizes = [1, 98], strides = [1, 1]} : vector<30x98xf32> to vector<1x98xf32>
    %142 = arith.select %135, %140, %141 : vector<1x98xi1>, vector<1x98xf32>
    %143 = vector.extract_strided_slice %7 {offsets = [7, 0], sizes = [1, 98], strides = [1, 1]} : vector<30x98xf32> to vector<1x98xf32>
    %144 = vector.extract_strided_slice %7 {offsets = [2, 0], sizes = [1, 98], strides = [1, 1]} : vector<30x98xf32> to vector<1x98xf32>
    %145 = arith.select %135, %143, %144 : vector<1x98xi1>, vector<1x98xf32>
    %146 = vector.extract_strided_slice %7 {offsets = [8, 0], sizes = [1, 98], strides = [1, 1]} : vector<30x98xf32> to vector<1x98xf32>
    %147 = vector.extract_strided_slice %7 {offsets = [3, 0], sizes = [1, 98], strides = [1, 1]} : vector<30x98xf32> to vector<1x98xf32>
    %148 = arith.select %135, %146, %147 : vector<1x98xi1>, vector<1x98xf32>
    %149 = vector.extract_strided_slice %7 {offsets = [9, 0], sizes = [1, 98], strides = [1, 1]} : vector<30x98xf32> to vector<1x98xf32>
    %150 = vector.extract_strided_slice %7 {offsets = [4, 0], sizes = [1, 98], strides = [1, 1]} : vector<30x98xf32> to vector<1x98xf32>
    %151 = arith.select %135, %149, %150 : vector<1x98xi1>, vector<1x98xf32>
    %152 = vector.extract_strided_slice %7 {offsets = [4, 0], sizes = [1, 98], strides = [1, 1]} : vector<30x98xf32> to vector<1x98xf32>
    %153 = vector.extract_strided_slice %7 {offsets = [9, 0], sizes = [1, 98], strides = [1, 1]} : vector<30x98xf32> to vector<1x98xf32>
    %154 = arith.select %135, %152, %153 : vector<1x98xi1>, vector<1x98xf32>
    %155 = vector.extract_strided_slice %8 {offsets = [5, 0], sizes = [1, 98], strides = [1, 1]} : vector<30x98xf32> to vector<1x98xf32>
    %156 = vector.extract_strided_slice %8 {offsets = [0, 0], sizes = [1, 98], strides = [1, 1]} : vector<30x98xf32> to vector<1x98xf32>
    %157 = arith.select %135, %155, %156 : vector<1x98xi1>, vector<1x98xf32>
    %158 = vector.extract_strided_slice %8 {offsets = [6, 0], sizes = [1, 98], strides = [1, 1]} : vector<30x98xf32> to vector<1x98xf32>
    %159 = vector.extract_strided_slice %8 {offsets = [1, 0], sizes = [1, 98], strides = [1, 1]} : vector<30x98xf32> to vector<1x98xf32>
    %160 = arith.select %135, %158, %159 : vector<1x98xi1>, vector<1x98xf32>
    %161 = vector.extract_strided_slice %8 {offsets = [7, 0], sizes = [1, 98], strides = [1, 1]} : vector<30x98xf32> to vector<1x98xf32>
    %162 = vector.extract_strided_slice %8 {offsets = [2, 0], sizes = [1, 98], strides = [1, 1]} : vector<30x98xf32> to vector<1x98xf32>
    %163 = arith.select %135, %161, %162 : vector<1x98xi1>, vector<1x98xf32>
    %164 = vector.extract_strided_slice %8 {offsets = [8, 0], sizes = [1, 98], strides = [1, 1]} : vector<30x98xf32> to vector<1x98xf32>
    %165 = vector.extract_strided_slice %8 {offsets = [3, 0], sizes = [1, 98], strides = [1, 1]} : vector<30x98xf32> to vector<1x98xf32>
    %166 = arith.select %135, %164, %165 : vector<1x98xi1>, vector<1x98xf32>
    %167 = arith.subf %151, %136 : vector<1x98xf32>
    %168 = arith.mulf %167, %167 : vector<1x98xf32>
    %cst_28 = arith.constant 0.000000e+00 : f32
    %169 = vector.broadcast %cst_28 : f32 to vector<1x98xf32>
    %170 = arith.select %21, %168, %169 : vector<1x98xi1>, vector<1x98xf32>
    %171 = vector.shape_cast %170 : vector<1x98xf32> to vector<1x1x98xf32>
    %cst_29 = arith.constant dense<0.000000e+00> : vector<1xf32>
    %172 = vector.multi_reduction <add>, %171, %cst_29 [1, 2] : vector<1x1x98xf32> to vector<1xf32>
    %173 = vector.shape_cast %172 : vector<1xf32> to vector<1x1x1xf32>
    %174 = vector.extract %173[0, 0, 0] : f32 from vector<1x1x1xf32>
    %175 = arith.subf %139, %157 : vector<1x98xf32>
    %176 = arith.mulf %175, %175 : vector<1x98xf32>
    %177 = arith.subf %142, %160 : vector<1x98xf32>
    %178 = arith.mulf %177, %177 : vector<1x98xf32>
    %179 = arith.addf %176, %178 : vector<1x98xf32>
    %180 = math.sqrt %145 : vector<1x98xf32>
    %181 = math.sqrt %163 : vector<1x98xf32>
    %182 = arith.subf %180, %181 : vector<1x98xf32>
    %183 = arith.mulf %182, %182 : vector<1x98xf32>
    %184 = arith.addf %179, %183 : vector<1x98xf32>
    %185 = math.sqrt %148 : vector<1x98xf32>
    %186 = math.sqrt %166 : vector<1x98xf32>
    %187 = arith.subf %185, %186 : vector<1x98xf32>
    %188 = arith.mulf %187, %187 : vector<1x98xf32>
    %189 = arith.addf %184, %188 : vector<1x98xf32>
    %cst_30 = arith.constant 0.000000e+00 : f32
    %190 = vector.broadcast %cst_30 : f32 to vector<1x98xf32>
    %191 = arith.select %21, %189, %190 : vector<1x98xi1>, vector<1x98xf32>
    %192 = vector.shape_cast %191 : vector<1x98xf32> to vector<1x1x98xf32>
    %cst_31 = arith.constant dense<0.000000e+00> : vector<1xf32>
    %193 = vector.multi_reduction <add>, %192, %cst_31 [1, 2] : vector<1x1x98xf32> to vector<1xf32>
    %194 = vector.shape_cast %193 : vector<1xf32> to vector<1x1x1xf32>
    %195 = vector.extract %194[0, 0, 0] : f32 from vector<1x1x1xf32>
    %196 = arith.mulf %154, %154 : vector<1x98xf32>
    %cst_32 = arith.constant 0.000000e+00 : f32
    %197 = vector.broadcast %cst_32 : f32 to vector<1x98xf32>
    %198 = arith.select %21, %196, %197 : vector<1x98xi1>, vector<1x98xf32>
    %199 = vector.shape_cast %198 : vector<1x98xf32> to vector<1x1x98xf32>
    %cst_33 = arith.constant dense<0.000000e+00> : vector<1xf32>
    %200 = vector.multi_reduction <add>, %199, %cst_33 [1, 2] : vector<1x1x98xf32> to vector<1xf32>
    %201 = vector.shape_cast %200 : vector<1xf32> to vector<1x1x1xf32>
    %202 = vector.extract %201[0, 0, 0] : f32 from vector<1x1x1xf32>
    %cst_34 = arith.constant 5.000000e+00 : f32
    %203 = arith.mulf %cst_34, %195 : f32
    %cst_35 = arith.constant 2.000000e+00 : f32
    %204 = arith.mulf %cst_35, %174 : f32
    %205 = arith.addf %203, %204 : f32
    %206 = arith.addf %205, %202 : f32
    %cst_36 = arith.constant 5.000000e-01 : f32
    %207 = arith.mulf %cst_36, %35 : f32
    %208 = arith.addf %206, %207 : f32
    %209 = arith.addf %208, %47 : f32
    %210 = vector.broadcast %209 : f32 to vector<1x8x128xf32>
    %c0_37 = arith.constant 0 : index
    %c0_38 = arith.constant 0 : index
    %c0_39 = arith.constant 0 : index
    %211 = vector.load %arg3[%c0_37, %c0_38, %c0_39] : memref<1x8x128xf32, #tpu.memory_space<vmem>>, vector<1x8x128xf32>
    tpu.vector_store %arg3[%c0_37, %c0_38, %c0_39], %210 {strides = array<i32>} : memref<1x8x128xf32, #tpu.memory_space<vmem>>, vector<1x8x128xf32>,
    return
  }
  func.func @transform_0(%arg0: i32) -> (i32, i32) {
    %c0_i32 = arith.constant 0 : i32
    %c0_i32_0 = arith.constant 0 : i32
    return %arg0, %c0_i32 : i32, i32
  }
  func.func @transform_1(%arg0: i32) -> (i32, i32) {
    %c0_i32 = arith.constant 0 : i32
    %c0_i32_0 = arith.constant 0 : i32
    return %arg0, %c0_i32 : i32, i32
  }
  func.func @transform_2(%arg0: i32) -> (i32, i32, i32) {
    %c0_i32 = arith.constant 0 : i32
    %c0_i32_0 = arith.constant 0 : i32
    %c0_i32_1 = arith.constant 0 : i32
    return %arg0, %c0_i32, %c0_i32_0 : i32, i32, i32
  }
}

</mosaic_0001>

<llo_original>
// kernel: tpu_custom_call.1
$region0: #{tpu_custom_call.1}
  #allocation0 [shape = 'u32[]', space=smem, size = 0x4, offset = 0x4, fixed_abs, tag = 'smem constant byte address 0x4 - core index']
  #allocation1 [shape = 'u32[72,128]{1,0:T(1,128)}', space=vmem, size = 0x9000, scoped, tag = 'internal scratch']
  %s0 = inlined_call_operand.vmem [shape: f32[98,30], index: 0, kind: input, shape index: {}]
  %s1 = inlined_call_operand.vmem [shape: f32[98,30], index: 1, kind: input, shape index: {}]
  %s2 = inlined_call_operand.hbm [shape: f32[1,8,128], index: 2, kind: output, shape index: {}]
  %s3 = sld [smem:[#allocation0]]
  $region18: #{tpu_custom_call.1} parent=0
    _
  %s5 = ssub.s32 1, %s3
  %s6 = scalar_select 0, %s5, %s3
  $region1: #{tpu_custom_call.1} parent=0
    #allocation2 [shape = 'u8[4096]{0}', space=vmem, size = 0x1000, scoped, tag = 'output window, operand 0, single buffered']
    #allocation3 [shape = 's32[1]{0}', space=sflag, size = 0x4, scoped, tag = 'scoped memory for tpu_custom_call.1']
    %7 = vsyncpa [#allocation3], 0
    // Predicated region
    $region2: #{tpu_custom_call.1} parent=1 // pred_check
      _
    $region3: #{tpu_custom_call.1} parent=1 // pred_check_branch
      %9 = sbr.rel (0) target = $region5
    $region4: #{tpu_custom_call.1} parent=1 // pred_region
      _
    $region5: #{tpu_custom_call.1} parent=1 // pred_fallthru
      _
    // Predicated region
    $region6: #{tpu_custom_call.1} parent=1 // pred_check
      _
    $region7: #{tpu_custom_call.1} parent=1 // pred_check_branch
      %11 = sbr.rel (0) target = $region9
    $region8: #{tpu_custom_call.1} parent=1 // pred_region
      _
    $region9: #{tpu_custom_call.1} parent=1 // pred_fallthru
      _
    %v12 = vld [vmem:[%s0] sm:$0xff]
    %v13 = vld [vmem:[%s0 + $0x8] sm:$0xff]
    %v14 = vld [vmem:[%s0 + $0x10] sm:$0xff]
    %v15 = vld [vmem:[%s0 + $0x18] sm:$0xff]
    %v16 = vld [vmem:[%s0 + $0x20] sm:$0xff]
    %v17 = vld [vmem:[%s0 + $0x28] sm:$0xff]
    %v18 = vld [vmem:[%s0 + $0x30] sm:$0xff]
    %v19 = vld [vmem:[%s0 + $0x38] sm:$0xff]
    %v20 = vld [vmem:[%s0 + $0x40] sm:$0xff]
    %v21 = vld [vmem:[%s0 + $0x48] sm:$0xff]
    %v22 = vld [vmem:[%s0 + $0x50] sm:$0xff]
    %v23 = vld [vmem:[%s0 + $0x58] sm:$0xff]
    %v24 = vld [vmem:[%s0 + $0x60] sm:$0x3]
    %v25 = vld [vmem:[%s1] sm:$0xff]
    %v26 = vld [vmem:[%s1 + $0x8] sm:$0xff]
    %v27 = vld [vmem:[%s1 + $0x10] sm:$0xff]
    %v28 = vld [vmem:[%s1 + $0x18] sm:$0xff]
    %v29 = vld [vmem:[%s1 + $0x20] sm:$0xff]
    %v30 = vld [vmem:[%s1 + $0x28] sm:$0xff]
    %v31 = vld [vmem:[%s1 + $0x30] sm:$0xff]
    %v32 = vld [vmem:[%s1 + $0x38] sm:$0xff]
    %v33 = vld [vmem:[%s1 + $0x40] sm:$0xff]
    %v34 = vld [vmem:[%s1 + $0x48] sm:$0xff]
    %v35 = vld [vmem:[%s1 + $0x50] sm:$0xff]
    %v36 = vld [vmem:[%s1 + $0x58] sm:$0xff]
    %v37 = vld [vmem:[%s1 + $0x60] sm:$0x3]
    %v38 = vlaneseq
    %v39 = vshrl.u32 %v38, 7
    %v40 = vadd.s32 %v39, 8
    %v41 = vadd.s32 %v39, 16
    %v42 = vadd.s32 %v39, 24
    %v43 = vlaneseq
    %v44 = vand.u32 %v43, 127
    %vm45 = vcmp.eq.s32.totalorder %v39, %v44
    %vm46 = vcmp.eq.s32.totalorder %v40, %v44
    %vm47 = vcmp.eq.s32.totalorder %v41, %v44
    %vm48 = vcmp.eq.s32.totalorder %v42, %v44
    %v49 = vsel %vm45, 1, 0
    %v50 = vsel %vm46, 1, 0
    %v51 = vsel %vm47, 1, 0
    %v52 = vsel %vm48, 1, 0
    %v53 = vcvt.s32.f32 %v49
    %v54 = vcvt.s32.f32 %v50
    %v55 = vcvt.s32.f32 %v51
    %v56 = vcvt.s32.f32 %v52
    %vm57 = vcmask 244736
    %v59 = vsel %vm57, %v53, 0
    %v62 = vsel %vm57, %v54, 0
    %v65 = vsel %vm57, %v55, 0
    %v68 = vsel %vm57, %v56, 0
    %v71 = vsel %vm57, %v12, 0
    %v74 = vsel %vm57, %v13, 0
    %v77 = vsel %vm57, %v14, 0
    %v80 = vsel %vm57, %v15, 0
    %v83 = vsel %vm57, %v16, 0
    %v86 = vsel %vm57, %v17, 0
    %v89 = vsel %vm57, %v18, 0
    %v92 = vsel %vm57, %v19, 0
    %v95 = vsel %vm57, %v20, 0
    %v98 = vsel %vm57, %v21, 0
    %v101 = vsel %vm57, %v22, 0
    %v104 = vsel %vm57, %v23, 0
    %v107 = vsel %vm57, %v24, 0
    %109 = vmatpush.xpose.msra.mxu0 0.0
    %110 = vmatpush.xpose.msra.mxu0 0.0
    %111 = vmatpush.xpose.msra.mxu0 0.0
    %v112 = vand.u32 %v107, 4294901760
    %113 = vmatpush.xpose.msra.mxu0 %v112
    %v114 = vand.u32 %v104, 4294901760
    %115 = vmatpush.xpose.msra.mxu0 %v114
    %v116 = vand.u32 %v101, 4294901760
    %117 = vmatpush.xpose.msra.mxu0 %v116
    %v118 = vand.u32 %v98, 4294901760
    %119 = vmatpush.xpose.msra.mxu0 %v118
    %v120 = vand.u32 %v95, 4294901760
    %121 = vmatpush.xpose.msra.mxu0 %v120
    %v122 = vand.u32 %v92, 4294901760
    %123 = vmatpush.xpose.msra.mxu0 %v122
    %v124 = vand.u32 %v89, 4294901760
    %125 = vmatpush.xpose.msra.mxu0 %v124
    %v126 = vand.u32 %v86, 4294901760
    %127 = vmatpush.xpose.msra.mxu0 %v126
    %v128 = vand.u32 %v83, 4294901760
    %129 = vmatpush.xpose.msra.mxu0 %v128
    %v130 = vand.u32 %v80, 4294901760
    %131 = vmatpush.xpose.msra.mxu0 %v130
    %v132 = vand.u32 %v77, 4294901760
    %133 = vmatpush.xpose.msra.mxu0 %v132
    %v134 = vand.u32 %v74, 4294901760
    %135 = vmatpush.xpose.msra.mxu0 %v134
    %v136 = vand.u32 %v71, 4294901760
    %137 = vmatpush.xpose.msra.mxu0 %v136
    %v138 = vand.u32 %v59, 4294901760
    %v139 = vsub.f32 %v59, %v138
    %v140 = vand.u32 %v139, 4294901760
    %v141 = vsub.f32 %v139, %v140
    %v142 = vand.u32 %v141, 4294901760
    %143 = vmatmul.f32.gmra.mxu0 %v142
    %v144 = vpop.f32.mrf.mxu0
    %v145 = vadd.f32 0.0, %v144
    %v146 = vand.u32 %v62, 4294901760
    %v147 = vsub.f32 %v62, %v146
    %v148 = vand.u32 %v147, 4294901760
    %v149 = vsub.f32 %v147, %v148
    %v150 = vand.u32 %v149, 4294901760
    %151 = vmatmul.f32.gmra.mxu0 %v150
    %v152 = vpop.f32.mrf.mxu0
    %v153 = vadd.f32 0.0, %v152
    %v154 = vand.u32 %v65, 4294901760
    %v155 = vsub.f32 %v65, %v154
    %v156 = vand.u32 %v155, 4294901760
    %v157 = vsub.f32 %v155, %v156
    %v158 = vand.u32 %v157, 4294901760
    %159 = vmatmul.f32.gmra.mxu0 %v158
    %v160 = vpop.f32.mrf.mxu0
    %v161 = vadd.f32 0.0, %v160
    %v162 = vand.u32 %v68, 4294901760
    %v163 = vsub.f32 %v68, %v162
    %v164 = vand.u32 %v163, 4294901760
    %v165 = vsub.f32 %v163, %v164
    %v166 = vand.u32 %v165, 4294901760
    %167 = vmatmul.f32.gmra.mxu0 %v166
    %v168 = vpop.f32.mrf.mxu0
    %v169 = vadd.f32 0.0, %v168
    %170 = vdwg.mxu0
    %171 = vmatpush.xpose.msra.mxu0 0.0
    %172 = vmatpush.xpose.msra.mxu0 0.0
    %173 = vmatpush.xpose.msra.mxu0 0.0
    %v174 = vand.u32 %v107, 4294901760
    %v175 = vsub.f32 %v107, %v174
    %v176 = vand.u32 %v175, 4294901760
    %v177 = vsub.f32 %v175, %v176
    %v178 = vand.u32 %v177, 4294901760
    %179 = vmatpush.xpose.msra.mxu0 %v178
    %v180 = vand.u32 %v104, 4294901760
    %v181 = vsub.f32 %v104, %v180
    %v182 = vand.u32 %v181, 4294901760
    %v183 = vsub.f32 %v181, %v182
    %v184 = vand.u32 %v183, 4294901760
    %185 = vmatpush.xpose.msra.mxu0 %v184
    %v186 = vand.u32 %v101, 4294901760
    %v187 = vsub.f32 %v101, %v186
    %v188 = vand.u32 %v187, 4294901760
    %v189 = vsub.f32 %v187, %v188
    %v190 = vand.u32 %v189, 4294901760
    %191 = vmatpush.xpose.msra.mxu0 %v190
    %v192 = vand.u32 %v98, 4294901760
    %v193 = vsub.f32 %v98, %v192
    %v194 = vand.u32 %v193, 4294901760
    %v195 = vsub.f32 %v193, %v194
    %v196 = vand.u32 %v195, 4294901760
    %197 = vmatpush.xpose.msra.mxu0 %v196
    %v198 = vand.u32 %v95, 4294901760
    %v199 = vsub.f32 %v95, %v198
    %v200 = vand.u32 %v199, 4294901760
    %v201 = vsub.f32 %v199, %v200
    %v202 = vand.u32 %v201, 4294901760
    %203 = vmatpush.xpose.msra.mxu0 %v202
    %v204 = vand.u32 %v92, 4294901760
    %v205 = vsub.f32 %v92, %v204
    %v206 = vand.u32 %v205, 4294901760
    %v207 = vsub.f32 %v205, %v206
    %v208 = vand.u32 %v207, 4294901760
    %209 = vmatpush.xpose.msra.mxu0 %v208
    %v210 = vand.u32 %v89, 4294901760
    %v211 = vsub.f32 %v89, %v210
    %v212 = vand.u32 %v211, 4294901760
    %v213 = vsub.f32 %v211, %v212
    %v214 = vand.u32 %v213, 4294901760
    %215 = vmatpush.xpose.msra.mxu0 %v214
    %v216 = vand.u32 %v86, 4294901760
    %v217 = vsub.f32 %v86, %v216
    %v218 = vand.u32 %v217, 4294901760
    %v219 = vsub.f32 %v217, %v218
    %v220 = vand.u32 %v219, 4294901760
    %221 = vmatpush.xpose.msra.mxu0 %v220
    %v222 = vand.u32 %v83, 4294901760
    %v223 = vsub.f32 %v83, %v222
    %v224 = vand.u32 %v223, 4294901760
    %v225 = vsub.f32 %v223, %v224
    %v226 = vand.u32 %v225, 4294901760
    %227 = vmatpush.xpose.msra.mxu0 %v226
    %v228 = vand.u32 %v80, 4294901760
    %v229 = vsub.f32 %v80, %v228
    %v230 = vand.u32 %v229, 4294901760
    %v231 = vsub.f32 %v229, %v230
    %v232 = vand.u32 %v231, 4294901760
    %233 = vmatpush.xpose.msra.mxu0 %v232
    %v234 = vand.u32 %v77, 4294901760
    %v235 = vsub.f32 %v77, %v234
    %v236 = vand.u32 %v235, 4294901760
    %v237 = vsub.f32 %v235, %v236
    %v238 = vand.u32 %v237, 4294901760
    %239 = vmatpush.xpose.msra.mxu0 %v238
    %v240 = vand.u32 %v74, 4294901760
    %v241 = vsub.f32 %v74, %v240
    %v242 = vand.u32 %v241, 4294901760
    %v243 = vsub.f32 %v241, %v242
    %v244 = vand.u32 %v243, 4294901760
    %245 = vmatpush.xpose.msra.mxu0 %v244
    %v246 = vand.u32 %v71, 4294901760
    %v247 = vsub.f32 %v71, %v246
    %v248 = vand.u32 %v247, 4294901760
    %v249 = vsub.f32 %v247, %v248
    %v250 = vand.u32 %v249, 4294901760
    %251 = vmatpush.xpose.msra.mxu0 %v250
    %v252 = vand.u32 %v59, 4294901760
    %253 = vmatmul.f32.gmra.mxu0 %v252
    %v254 = vpop.f32.mrf.mxu0
    %v255 = vadd.f32 %v145, %v254
    %v256 = vand.u32 %v62, 4294901760
    %257 = vmatmul.f32.gmra.mxu0 %v256
    %v258 = vpop.f32.mrf.mxu0
    %v259 = vadd.f32 %v153, %v258
    %v260 = vand.u32 %v65, 4294901760
    %261 = vmatmul.f32.gmra.mxu0 %v260
    %v262 = vpop.f32.mrf.mxu0
    %v263 = vadd.f32 %v161, %v262
    %v264 = vand.u32 %v68, 4294901760
    %265 = vmatmul.f32.gmra.mxu0 %v264
    %v266 = vpop.f32.mrf.mxu0
    %v267 = vadd.f32 %v169, %v266
    %268 = vdwg.mxu0
    %269 = vmatpush.xpose.msra.mxu0 0.0
    %270 = vmatpush.xpose.msra.mxu0 0.0
    %271 = vmatpush.xpose.msra.mxu0 0.0
    %v272 = vand.u32 %v107, 4294901760
    %v273 = vsub.f32 %v107, %v272
    %274 = vmatpush.xpose.msra.mxu0 %v273
    %v275 = vand.u32 %v104, 4294901760
    %v276 = vsub.f32 %v104, %v275
    %277 = vmatpush.xpose.msra.mxu0 %v276
    %v278 = vand.u32 %v101, 4294901760
    %v279 = vsub.f32 %v101, %v278
    %280 = vmatpush.xpose.msra.mxu0 %v279
    %v281 = vand.u32 %v98, 4294901760
    %v282 = vsub.f32 %v98, %v281
    %283 = vmatpush.xpose.msra.mxu0 %v282
    %v284 = vand.u32 %v95, 4294901760
    %v285 = vsub.f32 %v95, %v284
    %286 = vmatpush.xpose.msra.mxu0 %v285
    %v287 = vand.u32 %v92, 4294901760
    %v288 = vsub.f32 %v92, %v287
    %289 = vmatpush.xpose.msra.mxu0 %v288
    %v290 = vand.u32 %v89, 4294901760
    %v291 = vsub.f32 %v89, %v290
    %292 = vmatpush.xpose.msra.mxu0 %v291
    %v293 = vand.u32 %v86, 4294901760
    %v294 = vsub.f32 %v86, %v293
    %295 = vmatpush.xpose.msra.mxu0 %v294
    %v296 = vand.u32 %v83, 4294901760
    %v297 = vsub.f32 %v83, %v296
    %298 = vmatpush.xpose.msra.mxu0 %v297
    %v299 = vand.u32 %v80, 4294901760
    %v300 = vsub.f32 %v80, %v299
    %301 = vmatpush.xpose.msra.mxu0 %v300
    %v302 = vand.u32 %v77, 4294901760
    %v303 = vsub.f32 %v77, %v302
    %304 = vmatpush.xpose.msra.mxu0 %v303
    %v305 = vand.u32 %v74, 4294901760
    %v306 = vsub.f32 %v74, %v305
    %307 = vmatpush.xpose.msra.mxu0 %v306
    %v308 = vand.u32 %v71, 4294901760
    %v309 = vsub.f32 %v71, %v308
    %310 = vmatpush.xpose.msra.mxu0 %v309
    %v311 = vand.u32 %v59, 4294901760
    %v312 = vsub.f32 %v59, %v311
    %313 = vmatmul.f32.gmra.mxu0 %v312
    %v314 = vpop.f32.mrf.mxu0
    %v315 = vadd.f32 %v255, %v314
    %v316 = vand.u32 %v62, 4294901760
    %v317 = vsub.f32 %v62, %v316
    %318 = vmatmul.f32.gmra.mxu0 %v317
    %v319 = vpop.f32.mrf.mxu0
    %v320 = vadd.f32 %v259, %v319
    %v321 = vand.u32 %v65, 4294901760
    %v322 = vsub.f32 %v65, %v321
    %323 = vmatmul.f32.gmra.mxu0 %v322
    %v324 = vpop.f32.mrf.mxu0
    %v325 = vadd.f32 %v263, %v324
    %v326 = vand.u32 %v68, 4294901760
    %v327 = vsub.f32 %v68, %v326
    %328 = vmatmul.f32.gmra.mxu0 %v327
    %v329 = vpop.f32.mrf.mxu0
    %v330 = vadd.f32 %v267, %v329
    %331 = vdwg.mxu0
    %332 = vmatpush.xpose.msra.mxu0 0.0
    %333 = vmatpush.xpose.msra.mxu0 0.0
    %334 = vmatpush.xpose.msra.mxu0 0.0
    %v335 = vand.u32 %v107, 4294901760
    %336 = vmatpush.xpose.msra.mxu0 %v335
    %v337 = vand.u32 %v104, 4294901760
    %338 = vmatpush.xpose.msra.mxu0 %v337
    %v339 = vand.u32 %v101, 4294901760
    %340 = vmatpush.xpose.msra.mxu0 %v339
    %v341 = vand.u32 %v98, 4294901760
    %342 = vmatpush.xpose.msra.mxu0 %v341
    %v343 = vand.u32 %v95, 4294901760
    %344 = vmatpush.xpose.msra.mxu0 %v343
    %v345 = vand.u32 %v92, 4294901760
    %346 = vmatpush.xpose.msra.mxu0 %v345
    %v347 = vand.u32 %v89, 4294901760
    %348 = vmatpush.xpose.msra.mxu0 %v347
    %v349 = vand.u32 %v86, 4294901760
    %350 = vmatpush.xpose.msra.mxu0 %v349
    %v351 = vand.u32 %v83, 4294901760
    %352 = vmatpush.xpose.msra.mxu0 %v351
    %v353 = vand.u32 %v80, 4294901760
    %354 = vmatpush.xpose.msra.mxu0 %v353
    %v355 = vand.u32 %v77, 4294901760
    %356 = vmatpush.xpose.msra.mxu0 %v355
    %v357 = vand.u32 %v74, 4294901760
    %358 = vmatpush.xpose.msra.mxu0 %v357
    %v359 = vand.u32 %v71, 4294901760
    %360 = vmatpush.xpose.msra.mxu0 %v359
    %v361 = vand.u32 %v59, 4294901760
    %v362 = vsub.f32 %v59, %v361
    %v363 = vand.u32 %v362, 4294901760
    %364 = vmatmul.f32.gmra.mxu0 %v363
    %v365 = vpop.f32.mrf.mxu0
    %v366 = vadd.f32 %v315, %v365
    %v367 = vand.u32 %v62, 4294901760
    %v368 = vsub.f32 %v62, %v367
    %v369 = vand.u32 %v368, 4294901760
    %370 = vmatmul.f32.gmra.mxu0 %v369
    %v371 = vpop.f32.mrf.mxu0
    %v372 = vadd.f32 %v320, %v371
    %v373 = vand.u32 %v65, 4294901760
    %v374 = vsub.f32 %v65, %v373
    %v375 = vand.u32 %v374, 4294901760
    %376 = vmatmul.f32.gmra.mxu0 %v375
    %v377 = vpop.f32.mrf.mxu0
    %v378 = vadd.f32 %v325, %v377
    %v379 = vand.u32 %v68, 4294901760
    %v380 = vsub.f32 %v68, %v379
    %v381 = vand.u32 %v380, 4294901760
    %382 = vmatmul.f32.gmra.mxu0 %v381
    %v383 = vpop.f32.mrf.mxu0
    %v384 = vadd.f32 %v330, %v383
    %385 = vdwg.mxu0
    %386 = vmatpush.xpose.msra.mxu0 0.0
    %387 = vmatpush.xpose.msra.mxu0 0.0
    %388 = vmatpush.xpose.msra.mxu0 0.0
    %v389 = vand.u32 %v107, 4294901760
    %v390 = vsub.f32 %v107, %v389
    %v391 = vand.u32 %v390, 4294901760
    %392 = vmatpush.xpose.msra.mxu0 %v391
    %v393 = vand.u32 %v104, 4294901760
    %v394 = vsub.f32 %v104, %v393
    %v395 = vand.u32 %v394, 4294901760
    %396 = vmatpush.xpose.msra.mxu0 %v395
    %v397 = vand.u32 %v101, 4294901760
    %v398 = vsub.f32 %v101, %v397
    %v399 = vand.u32 %v398, 4294901760
    %400 = vmatpush.xpose.msra.mxu0 %v399
    %v401 = vand.u32 %v98, 4294901760
    %v402 = vsub.f32 %v98, %v401
    %v403 = vand.u32 %v402, 4294901760
    %404 = vmatpush.xpose.msra.mxu0 %v403
    %v405 = vand.u32 %v95, 4294901760
    %v406 = vsub.f32 %v95, %v405
    %v407 = vand.u32 %v406, 4294901760
    %408 = vmatpush.xpose.msra.mxu0 %v407
    %v409 = vand.u32 %v92, 4294901760
    %v410 = vsub.f32 %v92, %v409
    %v411 = vand.u32 %v410, 4294901760
    %412 = vmatpush.xpose.msra.mxu0 %v411
    %v413 = vand.u32 %v89, 4294901760
    %v414 = vsub.f32 %v89, %v413
    %v415 = vand.u32 %v414, 4294901760
    %416 = vmatpush.xpose.msra.mxu0 %v415
    %v417 = vand.u32 %v86, 4294901760
    %v418 = vsub.f32 %v86, %v417
    %v419 = vand.u32 %v418, 4294901760
    %420 = vmatpush.xpose.msra.mxu0 %v419
    %v421 = vand.u32 %v83, 4294901760
    %v422 = vsub.f32 %v83, %v421
    %v423 = vand.u32 %v422, 4294901760
    %424 = vmatpush.xpose.msra.mxu0 %v423
    %v425 = vand.u32 %v80, 4294901760
    %v426 = vsub.f32 %v80, %v425
    %v427 = vand.u32 %v426, 4294901760
    %428 = vmatpush.xpose.msra.mxu0 %v427
    %v429 = vand.u32 %v77, 4294901760
    %v430 = vsub.f32 %v77, %v429
    %v431 = vand.u32 %v430, 4294901760
    %432 = vmatpush.xpose.msra.mxu0 %v431
    %v433 = vand.u32 %v74, 4294901760
    %v434 = vsub.f32 %v74, %v433
    %v435 = vand.u32 %v434, 4294901760
    %436 = vmatpush.xpose.msra.mxu0 %v435
    %v437 = vand.u32 %v71, 4294901760
    %v438 = vsub.f32 %v71, %v437
    %v439 = vand.u32 %v438, 4294901760
    %440 = vmatpush.xpose.msra.mxu0 %v439
    %v441 = vand.u32 %v59, 4294901760
    %442 = vmatmul.f32.gmra.mxu0 %v441
    %v443 = vpop.f32.mrf.mxu0
    %v444 = vadd.f32 %v366, %v443
    %v445 = vand.u32 %v62, 4294901760
    %446 = vmatmul.f32.gmra.mxu0 %v445
    %v447 = vpop.f32.mrf.mxu0
    %v448 = vadd.f32 %v372, %v447
    %v449 = vand.u32 %v65, 4294901760
    %450 = vmatmul.f32.gmra.mxu0 %v449
    %v451 = vpop.f32.mrf.mxu0
    %v452 = vadd.f32 %v378, %v451
    %v453 = vand.u32 %v68, 4294901760
    %454 = vmatmul.f32.gmra.mxu0 %v453
    %v455 = vpop.f32.mrf.mxu0
    %v456 = vadd.f32 %v384, %v455
    %457 = vdwg.mxu0
    %458 = vmatpush.xpose.msra.mxu0 0.0
    %459 = vmatpush.xpose.msra.mxu0 0.0
    %460 = vmatpush.xpose.msra.mxu0 0.0
    %v461 = vand.u32 %v107, 4294901760
    %462 = vmatpush.xpose.msra.mxu0 %v461
    %v463 = vand.u32 %v104, 4294901760
    %464 = vmatpush.xpose.msra.mxu0 %v463
    %v465 = vand.u32 %v101, 4294901760
    %466 = vmatpush.xpose.msra.mxu0 %v465
    %v467 = vand.u32 %v98, 4294901760
    %468 = vmatpush.xpose.msra.mxu0 %v467
    %v469 = vand.u32 %v95, 4294901760
    %470 = vmatpush.xpose.msra.mxu0 %v469
    %v471 = vand.u32 %v92, 4294901760
    %472 = vmatpush.xpose.msra.mxu0 %v471
    %v473 = vand.u32 %v89, 4294901760
    %474 = vmatpush.xpose.msra.mxu0 %v473
    %v475 = vand.u32 %v86, 4294901760
    %476 = vmatpush.xpose.msra.mxu0 %v475
    %v477 = vand.u32 %v83, 4294901760
    %478 = vmatpush.xpose.msra.mxu0 %v477
    %v479 = vand.u32 %v80, 4294901760
    %480 = vmatpush.xpose.msra.mxu0 %v479
    %v481 = vand.u32 %v77, 4294901760
    %482 = vmatpush.xpose.msra.mxu0 %v481
    %v483 = vand.u32 %v74, 4294901760
    %484 = vmatpush.xpose.msra.mxu0 %v483
    %v485 = vand.u32 %v71, 4294901760
    %486 = vmatpush.xpose.msra.mxu0 %v485
    %v487 = vand.u32 %v59, 4294901760
    %488 = vmatmul.f32.gmra.mxu0 %v487
    %v489 = vpop.f32.mrf.mxu0
    %v490 = vadd.f32 %v444, %v489
    %v491 = vand.u32 %v62, 4294901760
    %492 = vmatmul.f32.gmra.mxu0 %v491
    %v493 = vpop.f32.mrf.mxu0
    %v494 = vadd.f32 %v448, %v493
    %v495 = vand.u32 %v65, 4294901760
    %496 = vmatmul.f32.gmra.mxu0 %v495
    %v497 = vpop.f32.mrf.mxu0
    %v498 = vadd.f32 %v452, %v497
    %v499 = vand.u32 %v68, 4294901760
    %500 = vmatmul.f32.gmra.mxu0 %v499
    %v501 = vpop.f32.mrf.mxu0
    %v502 = vadd.f32 %v456, %v501
    %503 = vdwg.mxu0
    %v505 = vsel %vm57, %v25, 0
    %v508 = vsel %vm57, %v26, 0
    %v511 = vsel %vm57, %v27, 0
    %v514 = vsel %vm57, %v28, 0
    %v517 = vsel %vm57, %v29, 0
    %v520 = vsel %vm57, %v30, 0
    %v523 = vsel %vm57, %v31, 0
    %v526 = vsel %vm57, %v32, 0
    %v529 = vsel %vm57, %v33, 0
    %v532 = vsel %vm57, %v34, 0
    %v535 = vsel %vm57, %v35, 0
    %v538 = vsel %vm57, %v36, 0
    %v541 = vsel %vm57, %v37, 0
    %543 = vmatpush.xpose.msra.mxu0 0.0
    %544 = vmatpush.xpose.msra.mxu0 0.0
    %545 = vmatpush.xpose.msra.mxu0 0.0
    %v546 = vand.u32 %v541, 4294901760
    %547 = vmatpush.xpose.msra.mxu0 %v546
    %v548 = vand.u32 %v538, 4294901760
    %549 = vmatpush.xpose.msra.mxu0 %v548
    %v550 = vand.u32 %v535, 4294901760
    %551 = vmatpush.xpose.msra.mxu0 %v550
    %v552 = vand.u32 %v532, 4294901760
    %553 = vmatpush.xpose.msra.mxu0 %v552
    %v554 = vand.u32 %v529, 4294901760
    %555 = vmatpush.xpose.msra.mxu0 %v554
    %v556 = vand.u32 %v526, 4294901760
    %557 = vmatpush.xpose.msra.mxu0 %v556
    %v558 = vand.u32 %v523, 4294901760
    %559 = vmatpush.xpose.msra.mxu0 %v558
    %v560 = vand.u32 %v520, 4294901760
    %561 = vmatpush.xpose.msra.mxu0 %v560
    %v562 = vand.u32 %v517, 4294901760
    %563 = vmatpush.xpose.msra.mxu0 %v562
    %v564 = vand.u32 %v514, 4294901760
    %565 = vmatpush.xpose.msra.mxu0 %v564
    %v566 = vand.u32 %v511, 4294901760
    %567 = vmatpush.xpose.msra.mxu0 %v566
    %v568 = vand.u32 %v508, 4294901760
    %569 = vmatpush.xpose.msra.mxu0 %v568
    %v570 = vand.u32 %v505, 4294901760
    %571 = vmatpush.xpose.msra.mxu0 %v570
    %v572 = vand.u32 %v59, 4294901760
    %v573 = vsub.f32 %v59, %v572
    %v574 = vand.u32 %v573, 4294901760
    %v575 = vsub.f32 %v573, %v574
    %v576 = vand.u32 %v575, 4294901760
    %577 = vmatmul.f32.gmra.mxu0 %v576
    %v578 = vpop.f32.mrf.mxu0
    %v579 = vadd.f32 0.0, %v578
    %v580 = vand.u32 %v62, 4294901760
    %v581 = vsub.f32 %v62, %v580
    %v582 = vand.u32 %v581, 4294901760
    %v583 = vsub.f32 %v581, %v582
    %v584 = vand.u32 %v583, 4294901760
    %585 = vmatmul.f32.gmra.mxu0 %v584
    %v586 = vpop.f32.mrf.mxu0
    %v587 = vadd.f32 0.0, %v586
    %v588 = vand.u32 %v65, 4294901760
    %v589 = vsub.f32 %v65, %v588
    %v590 = vand.u32 %v589, 4294901760
    %v591 = vsub.f32 %v589, %v590
    %v592 = vand.u32 %v591, 4294901760
    %593 = vmatmul.f32.gmra.mxu0 %v592
    %v594 = vpop.f32.mrf.mxu0
    %v595 = vadd.f32 0.0, %v594
    %v596 = vand.u32 %v68, 4294901760
    %v597 = vsub.f32 %v68, %v596
    %v598 = vand.u32 %v597, 4294901760
    %v599 = vsub.f32 %v597, %v598
    %v600 = vand.u32 %v599, 4294901760
    %601 = vmatmul.f32.gmra.mxu0 %v600
    %v602 = vpop.f32.mrf.mxu0
    %v603 = vadd.f32 0.0, %v602
    %604 = vdwg.mxu0
    %605 = vmatpush.xpose.msra.mxu0 0.0
    %606 = vmatpush.xpose.msra.mxu0 0.0
    %607 = vmatpush.xpose.msra.mxu0 0.0
    %v608 = vand.u32 %v541, 4294901760
    %v609 = vsub.f32 %v541, %v608
    %v610 = vand.u32 %v609, 4294901760
    %v611 = vsub.f32 %v609, %v610
    %v612 = vand.u32 %v611, 4294901760
    %613 = vmatpush.xpose.msra.mxu0 %v612
    %v614 = vand.u32 %v538, 4294901760
    %v615 = vsub.f32 %v538, %v614
    %v616 = vand.u32 %v615, 4294901760
    %v617 = vsub.f32 %v615, %v616
    %v618 = vand.u32 %v617, 4294901760
    %619 = vmatpush.xpose.msra.mxu0 %v618
    %v620 = vand.u32 %v535, 4294901760
    %v621 = vsub.f32 %v535, %v620
    %v622 = vand.u32 %v621, 4294901760
    %v623 = vsub.f32 %v621, %v622
    %v624 = vand.u32 %v623, 4294901760
    %625 = vmatpush.xpose.msra.mxu0 %v624
    %v626 = vand.u32 %v532, 4294901760
    %v627 = vsub.f32 %v532, %v626
    %v628 = vand.u32 %v627, 4294901760
    %v629 = vsub.f32 %v627, %v628
    %v630 = vand.u32 %v629, 4294901760
    %631 = vmatpush.xpose.msra.mxu0 %v630
    %v632 = vand.u32 %v529, 4294901760
    %v633 = vsub.f32 %v529, %v632
    %v634 = vand.u32 %v633, 4294901760
    %v635 = vsub.f32 %v633, %v634
    %v636 = vand.u32 %v635, 4294901760
    %637 = vmatpush.xpose.msra.mxu0 %v636
    %v638 = vand.u32 %v526, 4294901760
    %v639 = vsub.f32 %v526, %v638
    %v640 = vand.u32 %v639, 4294901760
    %v641 = vsub.f32 %v639, %v640
    %v642 = vand.u32 %v641, 4294901760
    %643 = vmatpush.xpose.msra.mxu0 %v642
    %v644 = vand.u32 %v523, 4294901760
    %v645 = vsub.f32 %v523, %v644
    %v646 = vand.u32 %v645, 4294901760
    %v647 = vsub.f32 %v645, %v646
    %v648 = vand.u32 %v647, 4294901760
    %649 = vmatpush.xpose.msra.mxu0 %v648
    %v650 = vand.u32 %v520, 4294901760
    %v651 = vsub.f32 %v520, %v650
    %v652 = vand.u32 %v651, 4294901760
    %v653 = vsub.f32 %v651, %v652
    %v654 = vand.u32 %v653, 4294901760
    %655 = vmatpush.xpose.msra.mxu0 %v654
    %v656 = vand.u32 %v517, 4294901760
    %v657 = vsub.f32 %v517, %v656
    %v658 = vand.u32 %v657, 4294901760
    %v659 = vsub.f32 %v657, %v658
    %v660 = vand.u32 %v659, 4294901760
    %661 = vmatpush.xpose.msra.mxu0 %v660
    %v662 = vand.u32 %v514, 4294901760
    %v663 = vsub.f32 %v514, %v662
    %v664 = vand.u32 %v663, 4294901760
    %v665 = vsub.f32 %v663, %v664
    %v666 = vand.u32 %v665, 4294901760
    %667 = vmatpush.xpose.msra.mxu0 %v666
    %v668 = vand.u32 %v511, 4294901760
    %v669 = vsub.f32 %v511, %v668
    %v670 = vand.u32 %v669, 4294901760
    %v671 = vsub.f32 %v669, %v670
    %v672 = vand.u32 %v671, 4294901760
    %673 = vmatpush.xpose.msra.mxu0 %v672
    %v674 = vand.u32 %v508, 4294901760
    %v675 = vsub.f32 %v508, %v674
    %v676 = vand.u32 %v675, 4294901760
    %v677 = vsub.f32 %v675, %v676
    %v678 = vand.u32 %v677, 4294901760
    %679 = vmatpush.xpose.msra.mxu0 %v678
    %v680 = vand.u32 %v505, 4294901760
    %v681 = vsub.f32 %v505, %v680
    %v682 = vand.u32 %v681, 4294901760
    %v683 = vsub.f32 %v681, %v682
    %v684 = vand.u32 %v683, 4294901760
    %685 = vmatpush.xpose.msra.mxu0 %v684
    %v686 = vand.u32 %v59, 4294901760
    %687 = vmatmul.f32.gmra.mxu0 %v686
    %v688 = vpop.f32.mrf.mxu0
    %v689 = vadd.f32 %v579, %v688
    %v690 = vand.u32 %v62, 4294901760
    %691 = vmatmul.f32.gmra.mxu0 %v690
    %v692 = vpop.f32.mrf.mxu0
    %v693 = vadd.f32 %v587, %v692
    %v694 = vand.u32 %v65, 4294901760
    %695 = vmatmul.f32.gmra.mxu0 %v694
    %v696 = vpop.f32.mrf.mxu0
    %v697 = vadd.f32 %v595, %v696
    %v698 = vand.u32 %v68, 4294901760
    %699 = vmatmul.f32.gmra.mxu0 %v698
    %v700 = vpop.f32.mrf.mxu0
    %v701 = vadd.f32 %v603, %v700
    %702 = vdwg.mxu0
    %703 = vmatpush.xpose.msra.mxu0 0.0
    %704 = vmatpush.xpose.msra.mxu0 0.0
    %705 = vmatpush.xpose.msra.mxu0 0.0
    %v706 = vand.u32 %v541, 4294901760
    %v707 = vsub.f32 %v541, %v706
    %708 = vmatpush.xpose.msra.mxu0 %v707
    %v709 = vand.u32 %v538, 4294901760
    %v710 = vsub.f32 %v538, %v709
    %711 = vmatpush.xpose.msra.mxu0 %v710
    %v712 = vand.u32 %v535, 4294901760
    %v713 = vsub.f32 %v535, %v712
    %714 = vmatpush.xpose.msra.mxu0 %v713
    %v715 = vand.u32 %v532, 4294901760
    %v716 = vsub.f32 %v532, %v715
    %717 = vmatpush.xpose.msra.mxu0 %v716
    %v718 = vand.u32 %v529, 4294901760
    %v719 = vsub.f32 %v529, %v718
    %720 = vmatpush.xpose.msra.mxu0 %v719
    %v721 = vand.u32 %v526, 4294901760
    %v722 = vsub.f32 %v526, %v721
    %723 = vmatpush.xpose.msra.mxu0 %v722
    %v724 = vand.u32 %v523, 4294901760
    %v725 = vsub.f32 %v523, %v724
    %726 = vmatpush.xpose.msra.mxu0 %v725
    %v727 = vand.u32 %v520, 4294901760
    %v728 = vsub.f32 %v520, %v727
    %729 = vmatpush.xpose.msra.mxu0 %v728
    %v730 = vand.u32 %v517, 4294901760
    %v731 = vsub.f32 %v517, %v730
    %732 = vmatpush.xpose.msra.mxu0 %v731
    %v733 = vand.u32 %v514, 4294901760
    %v734 = vsub.f32 %v514, %v733
    %735 = vmatpush.xpose.msra.mxu0 %v734
    %v736 = vand.u32 %v511, 4294901760
    %v737 = vsub.f32 %v511, %v736
    %738 = vmatpush.xpose.msra.mxu0 %v737
    %v739 = vand.u32 %v508, 4294901760
    %v740 = vsub.f32 %v508, %v739
    %741 = vmatpush.xpose.msra.mxu0 %v740
    %v742 = vand.u32 %v505, 4294901760
    %v743 = vsub.f32 %v505, %v742
    %744 = vmatpush.xpose.msra.mxu0 %v743
    %v745 = vand.u32 %v59, 4294901760
    %v746 = vsub.f32 %v59, %v745
    %747 = vmatmul.f32.gmra.mxu0 %v746
    %v748 = vpop.f32.mrf.mxu0
    %v749 = vadd.f32 %v689, %v748
    %v750 = vand.u32 %v62, 4294901760
    %v751 = vsub.f32 %v62, %v750
    %752 = vmatmul.f32.gmra.mxu0 %v751
    %v753 = vpop.f32.mrf.mxu0
    %v754 = vadd.f32 %v693, %v753
    %v755 = vand.u32 %v65, 4294901760
    %v756 = vsub.f32 %v65, %v755
    %757 = vmatmul.f32.gmra.mxu0 %v756
    %v758 = vpop.f32.mrf.mxu0
    %v759 = vadd.f32 %v697, %v758
    %v760 = vand.u32 %v68, 4294901760
    %v761 = vsub.f32 %v68, %v760
    %762 = vmatmul.f32.gmra.mxu0 %v761
    %v763 = vpop.f32.mrf.mxu0
    %v764 = vadd.f32 %v701, %v763
    %765 = vdwg.mxu0
    %766 = vmatpush.xpose.msra.mxu0 0.0
    %767 = vmatpush.xpose.msra.mxu0 0.0
    %768 = vmatpush.xpose.msra.mxu0 0.0
    %v769 = vand.u32 %v541, 4294901760
    %770 = vmatpush.xpose.msra.mxu0 %v769
    %v771 = vand.u32 %v538, 4294901760
    %772 = vmatpush.xpose.msra.mxu0 %v771
    %v773 = vand.u32 %v535, 4294901760
    %774 = vmatpush.xpose.msra.mxu0 %v773
    %v775 = vand.u32 %v532, 4294901760
    %776 = vmatpush.xpose.msra.mxu0 %v775
    %v777 = vand.u32 %v529, 4294901760
    %778 = vmatpush.xpose.msra.mxu0 %v777
    %v779 = vand.u32 %v526, 4294901760
    %780 = vmatpush.xpose.msra.mxu0 %v779
    %v781 = vand.u32 %v523, 4294901760
    %782 = vmatpush.xpose.msra.mxu0 %v781
    %v783 = vand.u32 %v520, 4294901760
    %784 = vmatpush.xpose.msra.mxu0 %v783
    %v785 = vand.u32 %v517, 4294901760
    %786 = vmatpush.xpose.msra.mxu0 %v785
    %v787 = vand.u32 %v514, 4294901760
    %788 = vmatpush.xpose.msra.mxu0 %v787
    %v789 = vand.u32 %v511, 4294901760
    %790 = vmatpush.xpose.msra.mxu0 %v789
    %v791 = vand.u32 %v508, 4294901760
    %792 = vmatpush.xpose.msra.mxu0 %v791
    %v793 = vand.u32 %v505, 4294901760
    %794 = vmatpush.xpose.msra.mxu0 %v793
    %v795 = vand.u32 %v59, 4294901760
    %v796 = vsub.f32 %v59, %v795
    %v797 = vand.u32 %v796, 4294901760
    %798 = vmatmul.f32.gmra.mxu0 %v797
    %v799 = vpop.f32.mrf.mxu0
    %v800 = vadd.f32 %v749, %v799
    %v801 = vand.u32 %v62, 4294901760
    %v802 = vsub.f32 %v62, %v801
    %v803 = vand.u32 %v802, 4294901760
    %804 = vmatmul.f32.gmra.mxu0 %v803
    %v805 = vpop.f32.mrf.mxu0
    %v806 = vadd.f32 %v754, %v805
    %v807 = vand.u32 %v65, 4294901760
    %v808 = vsub.f32 %v65, %v807
    %v809 = vand.u32 %v808, 4294901760
    %810 = vmatmul.f32.gmra.mxu0 %v809
    %v811 = vpop.f32.mrf.mxu0
    %v812 = vadd.f32 %v759, %v811
    %v813 = vand.u32 %v68, 4294901760
    %v814 = vsub.f32 %v68, %v813
    %v815 = vand.u32 %v814, 4294901760
    %816 = vmatmul.f32.gmra.mxu0 %v815
    %v817 = vpop.f32.mrf.mxu0
    %v818 = vadd.f32 %v764, %v817
    %819 = vdwg.mxu0
    %820 = vmatpush.xpose.msra.mxu0 0.0
    %821 = vmatpush.xpose.msra.mxu0 0.0
    %822 = vmatpush.xpose.msra.mxu0 0.0
    %v823 = vand.u32 %v541, 4294901760
    %v824 = vsub.f32 %v541, %v823
    %v825 = vand.u32 %v824, 4294901760
    %826 = vmatpush.xpose.msra.mxu0 %v825
    %v827 = vand.u32 %v538, 4294901760
    %v828 = vsub.f32 %v538, %v827
    %v829 = vand.u32 %v828, 4294901760
    %830 = vmatpush.xpose.msra.mxu0 %v829
    %v831 = vand.u32 %v535, 4294901760
    %v832 = vsub.f32 %v535, %v831
    %v833 = vand.u32 %v832, 4294901760
    %834 = vmatpush.xpose.msra.mxu0 %v833
    %v835 = vand.u32 %v532, 4294901760
    %v836 = vsub.f32 %v532, %v835
    %v837 = vand.u32 %v836, 4294901760
    %838 = vmatpush.xpose.msra.mxu0 %v837
    %v839 = vand.u32 %v529, 4294901760
    %v840 = vsub.f32 %v529, %v839
    %v841 = vand.u32 %v840, 4294901760
    %842 = vmatpush.xpose.msra.mxu0 %v841
    %v843 = vand.u32 %v526, 4294901760
    %v844 = vsub.f32 %v526, %v843
    %v845 = vand.u32 %v844, 4294901760
    %846 = vmatpush.xpose.msra.mxu0 %v845
    %v847 = vand.u32 %v523, 4294901760
    %v848 = vsub.f32 %v523, %v847
    %v849 = vand.u32 %v848, 4294901760
    %850 = vmatpush.xpose.msra.mxu0 %v849
    %v851 = vand.u32 %v520, 4294901760
    %v852 = vsub.f32 %v520, %v851
    %v853 = vand.u32 %v852, 4294901760
    %854 = vmatpush.xpose.msra.mxu0 %v853
    %v855 = vand.u32 %v517, 4294901760
    %v856 = vsub.f32 %v517, %v855
    %v857 = vand.u32 %v856, 4294901760
    %858 = vmatpush.xpose.msra.mxu0 %v857
    %v859 = vand.u32 %v514, 4294901760
    %v860 = vsub.f32 %v514, %v859
    %v861 = vand.u32 %v860, 4294901760
    %862 = vmatpush.xpose.msra.mxu0 %v861
    %v863 = vand.u32 %v511, 4294901760
    %v864 = vsub.f32 %v511, %v863
    %v865 = vand.u32 %v864, 4294901760
    %866 = vmatpush.xpose.msra.mxu0 %v865
    %v867 = vand.u32 %v508, 4294901760
    %v868 = vsub.f32 %v508, %v867
    %v869 = vand.u32 %v868, 4294901760
    %870 = vmatpush.xpose.msra.mxu0 %v869
    %v871 = vand.u32 %v505, 4294901760
    %v872 = vsub.f32 %v505, %v871
    %v873 = vand.u32 %v872, 4294901760
    %874 = vmatpush.xpose.msra.mxu0 %v873
    %v875 = vand.u32 %v59, 4294901760
    %876 = vmatmul.f32.gmra.mxu0 %v875
    %v877 = vpop.f32.mrf.mxu0
    %v878 = vadd.f32 %v800, %v877
    %v879 = vand.u32 %v62, 4294901760
    %880 = vmatmul.f32.gmra.mxu0 %v879
    %v881 = vpop.f32.mrf.mxu0
    %v882 = vadd.f32 %v806, %v881
    %v883 = vand.u32 %v65, 4294901760
    %884 = vmatmul.f32.gmra.mxu0 %v883
    %v885 = vpop.f32.mrf.mxu0
    %v886 = vadd.f32 %v812, %v885
    %v887 = vand.u32 %v68, 4294901760
    %888 = vmatmul.f32.gmra.mxu0 %v887
    %v889 = vpop.f32.mrf.mxu0
    %v890 = vadd.f32 %v818, %v889
    %891 = vdwg.mxu0
    %892 = vmatpush.xpose.msra.mxu0 0.0
    %893 = vmatpush.xpose.msra.mxu0 0.0
    %894 = vmatpush.xpose.msra.mxu0 0.0
    %v895 = vand.u32 %v541, 4294901760
    %896 = vmatpush.xpose.msra.mxu0 %v895
    %v897 = vand.u32 %v538, 4294901760
    %898 = vmatpush.xpose.msra.mxu0 %v897
    %v899 = vand.u32 %v535, 4294901760
    %900 = vmatpush.xpose.msra.mxu0 %v899
    %v901 = vand.u32 %v532, 4294901760
    %902 = vmatpush.xpose.msra.mxu0 %v901
    %v903 = vand.u32 %v529, 4294901760
    %904 = vmatpush.xpose.msra.mxu0 %v903
    %v905 = vand.u32 %v526, 4294901760
    %906 = vmatpush.xpose.msra.mxu0 %v905
    %v907 = vand.u32 %v523, 4294901760
    %908 = vmatpush.xpose.msra.mxu0 %v907
    %v909 = vand.u32 %v520, 4294901760
    %910 = vmatpush.xpose.msra.mxu0 %v909
    %v911 = vand.u32 %v517, 4294901760
    %912 = vmatpush.xpose.msra.mxu0 %v911
    %v913 = vand.u32 %v514, 4294901760
    %914 = vmatpush.xpose.msra.mxu0 %v913
    %v915 = vand.u32 %v511, 4294901760
    %916 = vmatpush.xpose.msra.mxu0 %v915
    %v917 = vand.u32 %v508, 4294901760
    %918 = vmatpush.xpose.msra.mxu0 %v917
    %v919 = vand.u32 %v505, 4294901760
    %920 = vmatpush.xpose.msra.mxu0 %v919
    %v921 = vand.u32 %v59, 4294901760
    %922 = vmatmul.f32.gmra.mxu0 %v921
    %v923 = vpop.f32.mrf.mxu0
    %v924 = vadd.f32 %v878, %v923
    %v925 = vand.u32 %v62, 4294901760
    %926 = vmatmul.f32.gmra.mxu0 %v925
    %v927 = vpop.f32.mrf.mxu0
    %v928 = vadd.f32 %v882, %v927
    %v929 = vand.u32 %v65, 4294901760
    %930 = vmatmul.f32.gmra.mxu0 %v929
    %v931 = vpop.f32.mrf.mxu0
    %v932 = vadd.f32 %v886, %v931
    %v933 = vand.u32 %v68, 4294901760
    %934 = vmatmul.f32.gmra.mxu0 %v933
    %v935 = vpop.f32.mrf.mxu0
    %v936 = vadd.f32 %v890, %v935
    %937 = vdwg.mxu0
    %s938 = smul.u32 0, 98
    %v939 = vstv %s938
    %v940 = vadd.s32 %v939, %v44
    %vm941 = vcmp.lt.s32.totalorder %v940, 98
    %vm942 = vcmp.gt.f32.partialorder %v924, 0.0
    %vm943 = vmand %vm942, %vm941
    %vm944 = vcmp.eq.f32.partialorder %v924, 0.0
    %vm945 = vmand %vm944, %vm941
    %v946 = vsub.f32 %v490, %v924
    %v947 = vmul.f32 %v946, %v946
    %v948 = vsub.f32 %v494, %v928
    %v949 = vmul.f32 %v948, %v948
    %v951 = vrot.slane %v949, 5
    %v953 = vadd.f32 %v947, %v951
    %v954 = vsel %vm945, %v953, 0.0
    %v956 = vrot.slane %v954, 4
    %vm958 = vcmask 794624
    %v959 = vsel %vm958, %v956, 0.0
    %960 = vadd.xlane.f32.xlu0 %v959
    %v961 = vpop.xlane.xlu0 %960
    %v962 = vrot.slane %v961, 4
    %v963 = vadd.f32 %v961, %v962
    %v964 = vrot.slane %v963, 2
    %v965 = vadd.f32 %v963, %v964
    %v966 = vrot.slane %v965, 1
    %v967 = vadd.f32 %v965, %v966
    %s968 = vtos %v967
    %v969 = vsub.f32 %v498, %v932
    %v970 = vsub.f32 %v502, %v936
    %v971 = vmul.f32 %v969, %v969
    %v972 = vmul.f32 %v970, %v970
    %vm975 = vcmask 1045504
    %v976 = vrot.slane %v949, 2
    %v977 = vrot.slane %v971, 2
    %v978 = vsel %vm975, %v976, %v977
    %v979 = vrot.slane %v972, 2
    %v980 = vsel %vm975, %v977, %v979
    %vm984 = vcmask 801792
    %v985 = vsel %vm984, %v978, 0.0
    %v986 = vsel %vm984, %v980, 0.0
    %v987 = vadd.f32 %v985, %v986
    %vm988 = vcmask 797696
    %v989 = vsel %vm988, %v979, 0.0
    %v990 = vadd.f32 %v987, %v989
    %v991 = vrot.slane %v990, 4
    %v992 = vadd.f32 %v990, %v991
    %v993 = vrot.slane %v992, 2
    %v994 = vadd.f32 %v992, %v993
    %v995 = vrot.slane %v994, 1
    %v996 = vadd.f32 %v994, %v995
    %v997 = vsel %vm943, %v996, 0.0
    %v999 = vrot.slane %v997, 4
    %v1001 = vsel %vm958, %v999, 0.0
    %1002 = vadd.xlane.f32.xlu0 %v1001
    %v1003 = vpop.xlane.xlu0 %1002
    %v1004 = vrot.slane %v1003, 4
    %v1005 = vadd.f32 %v1003, %v1004
    %v1006 = vrot.slane %v1005, 2
    %v1007 = vadd.f32 %v1005, %v1006
    %v1008 = vrot.slane %v1007, 1
    %v1009 = vadd.f32 %v1007, %v1008
    %s1010 = vtos %v1009
    %v1011 = vmul.f32 %v490, 0.14285715
    %v1012 = vmul.f32 %v490, 0.5
    %v1014 = vrot.slane %v1012, 2
    %v1016 = vsub.f32 %v1011, %v1014
    %v1017 = vadd.f32 %v1011, %v1014
    %v1018 = vmul.f32 %v494, 0.5
    %v1020 = vrot.slane %v1018, 2
    %v1022 = vsub.f32 %v1011, %v1020
    %v1023 = vadd.f32 %v1011, %v1020
    %v1024 = vmul.f32 %v924, 0.14285715
    %v1025 = vmul.f32 %v924, 0.5
    %v1027 = vrot.slane %v1025, 2
    %v1029 = vsub.f32 %v1024, %v1027
    %v1030 = vadd.f32 %v1024, %v1027
    %v1031 = vsub.f32 %v1030, %v1029
    %v1033 = vrot.slane %v1031, 1
    %v1035 = vmul.f32 %v1031, %v1033
    %v1036 = vsub.f32 %v1017, %v1016
    %v1038 = vrot.slane %v1036, 1
    %v1040 = vmul.f32 %v1036, %v1038
    %v1041 = vmin.f32 %v1017, %v1030
    %v1042 = vmax.f32 %v1016, %v1029
    %v1043 = vsub.f32 %v1041, %v1042
    %v1044 = vmax.f32 %v1043, 0.0
    %v1046 = vrot.slane %v1044, 1
    %v1048 = vmul.f32 %v1044, %v1046
    %v1049 = vadd.f32 %v1040, %v1035
    %v1050 = vsub.f32 %v1049, %v1048
    %v1051 = vrcp.pop %v1050
    %v1052 = vmul.f32 %v1048, %v1051
    %v1053 = vsub.f32 %v1023, %v1022
    %v1055 = vrot.slane %v1053, 1
    %v1057 = vmul.f32 %v1036, %v1055
    %v1059 = vrot.slane %v1030, 3
    %v1061 = vmin.f32 %v1017, %v1059
    %v1063 = vrot.slane %v1029, 3
    %v1065 = vmax.f32 %v1016, %v1063
    %v1066 = vsub.f32 %v1061, %v1065
    %v1067 = vmax.f32 %v1066, 0.0
    %v1068 = vmin.f32 %v1023, %v1059
    %v1069 = vmax.f32 %v1022, %v1063
    %v1070 = vsub.f32 %v1068, %v1069
    %v1071 = vmax.f32 %v1070, 0.0
    %v1073 = vrot.slane %v1071, 1
    %v1075 = vmul.f32 %v1067, %v1073
    %v1077 = vrot.slane %v1035, 3
    %v1079 = vadd.f32 %v1057, %v1077
    %v1080 = vsub.f32 %v1079, %v1075
    %v1081 = vrcp.pop %v1080
    %v1082 = vmul.f32 %v1075, %v1081
    %v1084 = vrot.slane %v1052, 3
    %vm1086 = vcmp.gt.f32.partialorder %v1082, %v1084
    %v1088 = vrot.slane %v1082, 5
    %v1090 = vmax.f32 %v1052, %v1088
    %v1092 = vrot.slane %v490, 3
    %v1094 = vsel %vm1086, %v490, %v1092
    %v1095 = vrot.slane %v490, 1
    %v1097 = vrot.slane %v490, 4
    %v1099 = vsel %vm1086, %v1095, %v1097
    %v1100 = vrot.slane %v490, 2
    %v1102 = vrot.slane %v490, 5
    %v1104 = vsel %vm1086, %v1100, %v1102
    %v1106 = vrot.slane %v494, 3
    %v1108 = vrot.slane %v490, 6
    %v1110 = vsel %vm1086, %v1106, %v1108
    %v1111 = vrot.slane %v494, 4
    %v1113 = vrot.slane %v490, 7
    %v1115 = vsel %vm1086, %v1111, %v1113
    %v1116 = vsel %vm1086, %v1113, %v1111
    %v1118 = vrot.slane %v924, 3
    %v1120 = vsel %vm1086, %v924, %v1118
    %v1121 = vrot.slane %v924, 1
    %v1123 = vrot.slane %v924, 4
    %v1125 = vsel %vm1086, %v1121, %v1123
    %v1126 = vrot.slane %v924, 2
    %v1128 = vrot.slane %v924, 5
    %v1130 = vsel %vm1086, %v1126, %v1128
    %v1132 = vrot.slane %v928, 3
    %v1134 = vrot.slane %v924, 6
    %v1136 = vsel %vm1086, %v1132, %v1134
    %v1138 = vrot.slane %v1090, 3
    %v1140 = vsub.f32 %v1115, %v1138
    %v1141 = vmul.f32 %v1140, %v1140
    %v1143 = vrot.slane %v1141, 1
    %v1145 = vsel %vm943, %v1143, 0.0
    %v1147 = vrot.slane %v1145, 4
    %v1149 = vsel %vm958, %v1147, 0.0
    %1150 = vadd.xlane.f32.xlu0 %v1149
    %v1151 = vpop.xlane.xlu0 %1150
    %v1152 = vrot.slane %v1151, 4
    %v1153 = vadd.f32 %v1151, %v1152
    %v1154 = vrot.slane %v1153, 2
    %v1155 = vadd.f32 %v1153, %v1154
    %v1156 = vrot.slane %v1155, 1
    %v1157 = vadd.f32 %v1155, %v1156
    %s1158 = vtos %v1157
    %v1159 = vsub.f32 %v1094, %v1120
    %v1160 = vmul.f32 %v1159, %v1159
    %v1161 = vsub.f32 %v1099, %v1125
    %v1162 = vmul.f32 %v1161, %v1161
    %v1163 = vadd.f32 %v1160, %v1162
    %v1164 = vrsqrt.pop %v1104
    %v1165 = vmul.f32 %v1164, %v1104
    %v1166 = vmul.f32 %v1165, %v1164
    %v1167 = vmul.f32 0.5, %v1166
    %v1168 = vsub.f32 1.5, %v1167
    %v1169 = vmul.f32 %v1164, %v1168
    %v1170 = vmul.f32 %v1104, %v1169
    %vm1171 = vcmp.eq.f32.partialorder %v1104, inf
    %v1172 = vsel %vm1171, %v1104, %v1170
    %vm1173 = vcmp.eq.f32.partialorder %v1104, 0.0
    %v1174 = vand.u32 %v1104, 2147483648
    %v1175 = vsel %vm1173, %v1174, %v1172
    %v1176 = vrsqrt.pop %v1130
    %v1177 = vmul.f32 %v1176, %v1130
    %v1178 = vmul.f32 %v1177, %v1176
    %v1179 = vmul.f32 0.5, %v1178
    %v1180 = vsub.f32 1.5, %v1179
    %v1181 = vmul.f32 %v1176, %v1180
    %v1182 = vmul.f32 %v1130, %v1181
    %vm1183 = vcmp.eq.f32.partialorder %v1130, inf
    %v1184 = vsel %vm1183, %v1130, %v1182
    %vm1185 = vcmp.eq.f32.partialorder %v1130, 0.0
    %v1186 = vand.u32 %v1130, 2147483648
    %v1187 = vsel %vm1185, %v1186, %v1184
    %v1188 = vsub.f32 %v1175, %v1187
    %v1189 = vmul.f32 %v1188, %v1188
    %v1190 = vadd.f32 %v1163, %v1189
    %v1191 = vrsqrt.pop %v1110
    %v1192 = vmul.f32 %v1191, %v1110
    %v1193 = vmul.f32 %v1192, %v1191
    %v1194 = vmul.f32 0.5, %v1193
    %v1195 = vsub.f32 1.5, %v1194
    %v1196 = vmul.f32 %v1191, %v1195
    %v1197 = vmul.f32 %v1110, %v1196
    %vm1198 = vcmp.eq.f32.partialorder %v1110, inf
    %v1199 = vsel %vm1198, %v1110, %v1197
    %vm1200 = vcmp.eq.f32.partialorder %v1110, 0.0
    %v1201 = vand.u32 %v1110, 2147483648
    %v1202 = vsel %vm1200, %v1201, %v1199
    %v1203 = vrsqrt.pop %v1136
    %v1204 = vmul.f32 %v1203, %v1136
    %v1205 = vmul.f32 %v1204, %v1203
    %v1206 = vmul.f32 0.5, %v1205
    %v1207 = vsub.f32 1.5, %v1206
    %v1208 = vmul.f32 %v1203, %v1207
    %v1209 = vmul.f32 %v1136, %v1208
    %vm1210 = vcmp.eq.f32.partialorder %v1136, inf
    %v1211 = vsel %vm1210, %v1136, %v1209
    %vm1212 = vcmp.eq.f32.partialorder %v1136, 0.0
    %v1213 = vand.u32 %v1136, 2147483648
    %v1214 = vsel %vm1212, %v1213, %v1211
    %v1215 = vsub.f32 %v1202, %v1214
    %v1216 = vmul.f32 %v1215, %v1215
    %v1217 = vadd.f32 %v1190, %v1216
    %v1219 = vrot.slane %v1217, 1
    %v1221 = vsel %vm943, %v1219, 0.0
    %v1223 = vrot.slane %v1221, 4
    %v1225 = vsel %vm958, %v1223, 0.0
    %1226 = vadd.xlane.f32.xlu0 %v1225
    %v1227 = vpop.xlane.xlu0 %1226
    %v1228 = vrot.slane %v1227, 4
    %v1229 = vadd.f32 %v1227, %v1228
    %v1230 = vrot.slane %v1229, 2
    %v1231 = vadd.f32 %v1229, %v1230
    %v1232 = vrot.slane %v1231, 1
    %v1233 = vadd.f32 %v1231, %v1232
    %s1234 = vtos %v1233
    %v1235 = vmul.f32 %v1116, %v1116
    %v1237 = vrot.slane %v1235, 1
    %v1239 = vsel %vm943, %v1237, 0.0
    %v1241 = vrot.slane %v1239, 4
    %v1243 = vsel %vm958, %v1241, 0.0
    %1244 = vadd.xlane.f32.xlu0 %v1243
    %v1245 = vpop.xlane.xlu0 %1244
    %v1246 = vrot.slane %v1245, 4
    %v1247 = vadd.f32 %v1245, %v1246
    %v1248 = vrot.slane %v1247, 2
    %v1249 = vadd.f32 %v1247, %v1248
    %v1250 = vrot.slane %v1249, 1
    %v1251 = vadd.f32 %v1249, %v1250
    %s1252 = vtos %v1251
    %s1253 = smul.f32 %s1234, 5.0
    %s1254 = smul.f32 %s1158, 2.0
    %s1255 = sadd.f32 %s1253, %s1254
    %s1256 = sadd.f32 %s1255, %s1252
    %s1257 = smul.f32 %s968, 0.5
    %s1258 = sadd.f32 %s1256, %s1257
    %s1259 = sadd.f32 %s1258, %s1010
    %v1260 = vstv %s1259
    %1261 = vst [vmem:[#allocation2] sm:$0xff] %v1260
    // Predicated region
    $region10: #{tpu_custom_call.1} parent=1 // pred_check
      _
    $region11: #{tpu_custom_call.1} parent=1 // pred_check_branch
      %1263 = sbr.rel (0) target = $region13
    $region12: #{tpu_custom_call.1} parent=1 // pred_region
      %1265 = vsyncadd [#allocation3], 0
      %s1267 = sshll.u32 [#allocation2], 4
      %s1268 = int_to_ptr.vmem [resolvable:$true] %s1267
      %s1269 = sshll.u32 %s2, 4
      %s1270 = int_to_ptr.hbm [resolvable:$true] %s1269
      %1272 = dma.vmem_to_hbm [thread:$0]  %s1268, 128, %s1270, [#allocation3]
    $region13: #{tpu_custom_call.1} parent=1 // pred_fallthru
      _
    // Predicated region
    $region14: #{tpu_custom_call.1} parent=1 // pred_check
      _
    $region15: #{tpu_custom_call.1} parent=1 // pred_check_branch
      %1274 = sbr.rel (0) target = $region17
    $region16: #{tpu_custom_call.1} parent=1 // pred_region
      %1276 = dma.done [#allocation3], 128
    $region17: #{tpu_custom_call.1} parent=1 // pred_fallthru
      _
    %1277 = vsyncpa [#allocation3], 1

</llo_original>
